<compile_context>
chip_gen: v7x
topology: tpu7x:2x2x1
jax: 0.10.0
libtpu: 0.0.40
codegen_flags: <defaults>
</compile_context>

<pallas_src>
import math

import jax
import jax.numpy as jnp
from jax.experimental import pallas as pl
from jax.experimental.pallas import tpu as pltpu


# ----------------------------------------------------------------------------------
# Init-time buffer: identical formula to the torch __init__.
# ----------------------------------------------------------------------------------
def make_sincos_pe(max_len, d_model, dtype=jnp.float32):
    assert d_model % 2 == 0, "torch reference requires an even d_model"
    position = jnp.arange(max_len, dtype=jnp.float32)[:, None]                 # (max_len, 1)
    div_term = jnp.exp(jnp.arange(0, d_model, 2, dtype=jnp.float32)
                       * (-math.log(10000.0) / d_model))                        # (d_model//2,)
    ang = position * div_term                                                   # (max_len, d//2)
    pe = jnp.zeros((max_len, d_model), dtype)
    pe = pe.at[:, 0::2].set(jnp.sin(ang).astype(dtype))
    pe = pe.at[:, 1::2].set(jnp.cos(ang).astype(dtype))
    return pe


# ----------------------------------------------------------------------------------
# Kernel: out_tile = x_tile + pos_weight * pe_tile   (f32 accumulate, cast to out dtype)
#   w_ref  : (1,)    f32 scalar in SMEM (scalar prefetch)
#   x_ref  : (tr, W) VMEM
#   pe_ref : (tr, W) VMEM (resident across the inner batch loop)
#   o_ref  : (tr, W) VMEM
# ----------------------------------------------------------------------------------
def _pos_enc_kernel(w_ref, x_ref, pe_ref, o_ref):
    w = w_ref[0]
    x = x_ref[...].astype(jnp.float32)
    pe = pe_ref[...].astype(jnp.float32)
    o_ref[...] = (x + w * pe).astype(o_ref.dtype)


# ----------------------------------------------------------------------------------
# Forward wrapper.
# ----------------------------------------------------------------------------------
def cmqe_positional_encoding_fwd(x, pe, pe_flat, s0, pos_weight,
                                 *, tile_budget_bytes=1 << 20):
    """x: (B, L, D); pe: (max_len, D); pe_flat: (ceil(max_len/s0), s0*D); pos_weight: (1,)."""
    B, L, D = x.shape
    max_len = pe.shape[0]
    assert D == pe.shape[1] and L <= max_len

    # ---- layout: per-batch sublane/lane-dense (rows, W) slab -------------------------
    if L % s0 == 0:
        s, pe_src = s0, pe_flat      # lane-dense: W = s0*D is a multiple of 128
    else:
        # TODO(synk): lane-narrow fallback (W = D, masked partial stores) when L % s0 != 0.
        s, pe_src = 1, pe
    rows, W = L // s, s * D
    x2 = x.reshape(B, rows, W)       # contiguous row-major reshape: layout plumbing only

    # ---- row-tile size: ~1 MiB/tile keeps double-buffered x-in + out + pe under
    # the default scoped VMEM on every generation (v5e 16 MiB ... v7x 64 MiB physical).
    itemsize = jnp.dtype(x.dtype).itemsize
    max_tr = max(1, tile_budget_bytes // (W * itemsize))
    if rows < 8:
        tr = rows                    # single tiny block; pe's row dim must equal tr
        pe_src = pe_src[:rows]       # tiny fallback slice (only hit for very short seqs)
    else:
        tr = min(rows, max(max_tr, 8))
        if tr % 8:
            tr = max(8, (tr // 8) * 8)   # keep the sublane dim a multiple of 8
    nrt = pl.cdiv(rows, tr)

    # Explicit output-dtype decision: match x (== torch result when everything is f32;
    # keeps bf16 activations bf16 end-to-end for the bandwidth win).
    out_dtype = x.dtype
    w = jnp.asarray(pos_weight, jnp.float32).reshape(1)

    flops = 2 * B * L * D
    bytes_accessed = (itemsize * B * L * D
                      + jnp.dtype(out_dtype).itemsize * B * L * D
                      + jnp.dtype(pe.dtype).itemsize * L * D)

    out2 = pl.pallas_call(
        _pos_enc_kernel,
        out_shape=jax.ShapeDtypeStruct((B, rows, W), out_dtype),
        grid_spec=pltpu.PrefetchScalarGridSpec(
            num_scalar_prefetch=1,               # pos_weight -> SMEM scalar
            grid=(nrt, B),                       # batch innermost -> pe tile stays resident
            in_specs=[
                pl.BlockSpec((None, tr, W), lambda r, b, w_ref: (b, r, 0)),   # x
                pl.BlockSpec((tr, W), lambda r, b, w_ref: (r, 0)),            # pe
            ],
            out_specs=pl.BlockSpec((None, tr, W), lambda r, b, w_ref: (b, r, 0)),
        ),
        compiler_params=pltpu.CompilerParams(
            dimension_semantics=("parallel", "parallel")),   # shards across v7x's 2 TCs
        cost_estimate=pl.CostEstimate(flops=flops, transcendentals=0,
                                      bytes_accessed=bytes_accessed),
    )(w, x2, pe_src)
    # TODO(synk): pass input_output_aliases={1: 0} when the caller can donate x's buffer.
    return out2.reshape(B, L, D)


# ----------------------------------------------------------------------------------
# Module-style wrapper mirroring the torch nn.Module.
# ----------------------------------------------------------------------------------
class CMQEPositionalEncodingPallas:
    def __init__(self, d_model, max_len=5000, dtype=jnp.float32):
        self.d_model = d_model
        self.max_len = max_len
        self.pe = make_sincos_pe(max_len, d_model, dtype)      # register_buffer('pe', ...)
        self.pos_weight = jnp.ones((1,), jnp.float32)          # nn.Parameter(torch.ones(1))
        # Pre-flatten ONCE at init to a lane-dense (max_rows, s0*D) slab so forward
        # never pushes a pe slice/reshape through HBM per call.
        self.s0 = 128 // math.gcd(d_model, 128)
        max_rows = -(-max_len // self.s0)
        pad = max_rows * self.s0 - max_len
        pe_pad = jnp.pad(self.pe, ((0, pad), (0, 0))) if pad else self.pe
        self.pe_flat = pe_pad.reshape(max_rows, self.s0 * d_model)

    def __call__(self, x, *, tile_budget_bytes=1 << 20):
        return cmqe_positional_encoding_fwd(x, self.pe, self.pe_flat, self.s0,
                                            self.pos_weight,
                                            tile_budget_bytes=tile_budget_bytes)


# ----------------------------------------------------------------------------------
# Self-contained checks (small shapes).
# ----------------------------------------------------------------------------------
if __name__ == "__main__":
    D, MAX_LEN = 32, 128
    key = jax.random.PRNGKey(0)
    kx1, kx2, kx3, kw = jax.random.split(key, 4)

    mod = CMQEPositionalEncodingPallas(D, MAX_LEN)
    # torch initializes pos_weight = ones(1); perturb deterministically so the
    # scalar-multiply path is actually exercised.
    mod.pos_weight = jnp.ones((1,), jnp.float32) + 0.25 * jax.random.normal(kw, (1,), jnp.float32)

    def ref_fwd(x):
        L = x.shape[1]
        return x + mod.pos_weight[0] * mod.pe[:L][None, :, :]

    # 1) Small, single-block path (rows < 8, pe sliced to match): B=2, L=16.
    x1 = jax.random.normal(kx1, (2, 16, D), jnp.float32)
    o1 = mod(x1)
    jax.block_until_ready(o1)
    assert o1.shape == x1.shape
    assert bool(jnp.allclose(o1, ref_fwd(x1), rtol=1e-6, atol=1e-6))

    # 2) Multi-tile pipelined path with a ragged last row-tile and full resident pe_flat:
    #    B=3, L=80 -> rows=20, forced tr=8 via a tiny tile budget -> grid=(3, 3).
    x2 = jax.random.normal(kx2, (3, 80, D), jnp.float32)
    o2 = mod(x2, tile_budget_bytes=8 * 128 * 4)
    jax.block_until_ready(o2)
    assert bool(jnp.allclose(o2, ref_fwd(x2), rtol=1e-6, atol=1e-6))

    # 3) Lane-narrow fallback (L not a multiple of s0): B=2, L=10.
    x3 = jax.random.normal(kx3, (2, 10, D), jnp.float32)
    o3 = mod(x3)
    jax.block_until_ready(o3)
    assert bool(jnp.allclose(o3, ref_fwd(x3), rtol=1e-6, atol=1e-6))

    print("KERNEL_OK")
</pallas_src>

<mosaic_0001>
module attributes {stable_mosaic.version = 11 : i64} {
  func.func @_pos_enc_kernel(%arg0: i32, %arg1: i32, %arg2: memref<1xf32, #tpu.memory_space<smem>>, %arg3: memref<1x4x128xf32, #tpu.memory_space<vmem>>, %arg4: memref<4x128xf32, #tpu.memory_space<vmem>>, %arg5: memref<1x4x128xf32, #tpu.memory_space<vmem>>) attributes {dimension_semantics = [#tpu.dimension_semantics<parallel>, #tpu.dimension_semantics<parallel>], iteration_bounds = array<i64: 1, 2>, scalar_prefetch = 1 : i64, scratch_operands = 0 : i64, tpu.core_type = #tpu.core_type<tc>, window_params = [{transform_indices = @transform_0, window_bounds = array<i64: 1, 4, 128>}, {transform_indices = @transform_1, window_bounds = array<i64: 4, 128>}, {transform_indices = @transform_2, window_bounds = array<i64: 1, 4, 128>}]} {
    %c0 = arith.constant 0 : index
    %0 = memref.load %arg2[%c0] : memref<1xf32, #tpu.memory_space<smem>>
    %c0_0 = arith.constant 0 : index
    %c0_1 = arith.constant 0 : index
    %c0_2 = arith.constant 0 : index
    %1 = vector.load %arg3[%c0_0, %c0_1, %c0_2] : memref<1x4x128xf32, #tpu.memory_space<vmem>>, vector<1x4x128xf32>
    %2 = vector.shape_cast %1 : vector<1x4x128xf32> to vector<4x128xf32>
    %c0_3 = arith.constant 0 : index
    %c0_4 = arith.constant 0 : index
    %3 = vector.load %arg4[%c0_3, %c0_4] : memref<4x128xf32, #tpu.memory_space<vmem>>, vector<4x128xf32>
    %4 = vector.broadcast %0 : f32 to vector<4x128xf32>
    %5 = arith.mulf %4, %3 : vector<4x128xf32>
    %6 = arith.addf %2, %5 : vector<4x128xf32>
    %c0_5 = arith.constant 0 : index
    %c0_6 = arith.constant 0 : index
    %c0_7 = arith.constant 0 : index
    %7 = vector.load %arg5[%c0_5, %c0_6, %c0_7] : memref<1x4x128xf32, #tpu.memory_space<vmem>>, vector<1x4x128xf32>
    %8 = vector.shape_cast %7 : vector<1x4x128xf32> to vector<4x128xf32>
    %9 = vector.shape_cast %6 : vector<4x128xf32> to vector<1x4x128xf32>
    tpu.vector_store %arg5[%c0_5, %c0_6, %c0_7], %9 {strides = array<i32>} : memref<1x4x128xf32, #tpu.memory_space<vmem>>, vector<1x4x128xf32>,
    return
  }
  func.func @transform_0(%arg0: i32, %arg1: i32, %arg2: memref<1xf32, #tpu.memory_space<smem>>) -> (i32, i32, i32) {
    %c0_i32 = arith.constant 0 : i32
    %c0_i32_0 = arith.constant 0 : i32
    return %arg1, %arg0, %c0_i32 : i32, i32, i32
  }
  func.func @transform_1(%arg0: i32, %arg1: i32, %arg2: memref<1xf32, #tpu.memory_space<smem>>) -> (i32, i32) {
    %c0_i32 = arith.constant 0 : i32
    %c0_i32_0 = arith.constant 0 : i32
    return %arg0, %c0_i32 : i32, i32
  }
  func.func @transform_2(%arg0: i32, %arg1: i32, %arg2: memref<1xf32, #tpu.memory_space<smem>>) -> (i32, i32, i32) {
    %c0_i32 = arith.constant 0 : i32
    %c0_i32_0 = arith.constant 0 : i32
    return %arg1, %arg0, %c0_i32 : i32, i32, i32
  }
}

</mosaic_0001>

<llo_original>
// kernel: tpu_custom_call.1
$region0: #{tpu_custom_call.1}
  #allocation0 [shape = 'u32[]', space=smem, size = 0x4, offset = 0x4, fixed_abs, tag = 'smem constant byte address 0x4 - core index']
  #allocation1 [shape = 'u32[144,128]{1,0:T(1,128)}', space=vmem, size = 0x12000, scoped, tag = 'internal scratch']
  #allocation2 [shape = 's32[1]{0}', space=sflag, size = 0x4, scoped, tag = 'scoped memory for tpu_custom_call.1']
  #allocation3 [shape = 'f32[1]{0:T(128)S(6)}', space=smem, size = 0x200, scoped, tag = 'prefetched SMEM operand 0']
  %s0 = inlined_call_operand.<no memory space> [shape: f32[1], index: 0, kind: input, shape index: {}]
  %s1 = inlined_call_operand.hbm [shape: f32[2,4,128], index: 1, kind: input, shape index: {}]
  %s2 = inlined_call_operand.vmem [shape: f32[4,128], index: 2, kind: input, shape index: {}]
  %s3 = inlined_call_operand.hbm [shape: f32[2,4,128], index: 3, kind: output, shape index: {}]
  %s4 = sld [smem:[#allocation0]]
  $region45: #{tpu_custom_call.1} parent=0
    _
  %s6 = ssub.s32 1, %s4
  %s7 = scalar_select 0, %s6, %s4
  %8 = sst [smem:[#allocation3]] %s0
  $region1: #{tpu_custom_call.1} parent=0
    #allocation4 [shape = 'u8[4096]{0}', space=vmem, size = 0x1000, scoped, tag = 'input window, operand 1']
    #allocation5 [shape = 's32[2]{0}', space=sflag, size = 0x8, scoped, tag = 'scoped memory for tpu_custom_call.1']
    #allocation6 [shape = 's32[2]{0}', space=sflag, size = 0x8, scoped, tag = 'scoped memory for tpu_custom_call.1']
    #allocation7 [shape = 'u8[4096]{0}', space=vmem, size = 0x1000, scoped, tag = 'output window, operand 0']
    %9 = vsyncpa [#allocation5], 0
    %s10 = scalar_lea.sflag [#allocation5], 1
    %11 = vsyncpa %s10, 0
    %12 = vsyncpa [#allocation6], 0
    %s13 = scalar_lea.sflag [#allocation6], 1
    %14 = vsyncpa %s13, 0
    loop: start=0, step=1, limit=4
    $region2: #{tpu_custom_call.1} parent=1 // loop_pre_header
      _
    $region3: #{tpu_custom_call.1} parent=1 // loop_header
      %s16 = sphi 0, %s20
      %p17 = scmp.ge.s32.totalorder %s16, 4
      %s23 = sphi 0, %s35
      %s24 = sphi 0, %s31
      %s25 = sphi 0, %s23
      %s26 = sphi 0, %s24
      %s27 = sphi 0, %s25
      %s28 = sphi 0, %s26
      %s40 = sphi 0, %s42
      %s43 = sphi 0, %s40
      %s44 = sphi 0, %s43
      %s60 = sphi 0, %s44
      %s66 = sphi 0, %s68
      %s69 = sphi 0, %s66
      %s70 = sphi 0, %s69
      %s86 = sphi 0, %s70
      %s94 = sphi 0, %s96
      %s97 = sphi 0, %s94
      %s98 = sphi 0, %s97
      %s114 = sphi 0, %s98
    $region4: #{tpu_custom_call.1} parent=1 // loop_header_branch
      %19 = sbr.rel (%p17) target = $region8
    $region5: #{tpu_custom_call.1} parent=1 // loop_body
      %s21 = ssub.s32 %s16, 1
      %s22 = ssub.s32 %s16, 2
      %s29 = sadd.s32 1, %s24
      %p30 = scmp.ge.s32.totalorder %s29, 2
      %s31 = scalar_select %p30, 0, %s29
      %s32 = sadd.s32 1, %s23
      %s33 = scalar_select %p30, %s32, %s23
      %p34 = scmp.ge.s32.totalorder %s33, 1
      %s35 = scalar_select %p34, 0, %s33
      %s36 = ssub.s32 %s24, %s31
      %s37 = ssub.s32 %s23, %s35
      %s38 = sor.u32 %s36, %s37
      %p39 = scmp.eq.s32.totalorder %s38, 0
      %s41 = sadd.s32 %s40, 1
      %s42 = scalar_select %p39, %s40, %s41
      %p45 = pneg %p39
      %p46 = scmp.eq.s32.totalorder %s16, 1
      %p47 = por %p45, %p46
      %p48 = scmp.ne.s32.totalorder %s40, %s43
      %p49 = scmp.eq.s32.totalorder %s16, 0
      %p50 = por %p48, %p49
      %p51 = scmp.ne.s32.totalorder %s40, %s43
      %p52 = scmp.eq.s32.totalorder %s21, 1
      %p53 = por %p51, %p52
      %p54 = scmp.ne.s32.totalorder %s43, %s44
      %p55 = scmp.eq.s32.totalorder %s21, 0
      %p56 = por %p54, %p55
      %p57 = scmp.ne.s32.totalorder %s43, %s44
      %p58 = scmp.eq.s32.totalorder %s22, 1
      %p59 = por %p57, %p58
      %p61 = scmp.ne.s32.totalorder %s44, %s60
      %p62 = scmp.eq.s32.totalorder %s22, 0
      %p63 = por %p61, %p62
      %s64 = ssub.s32 %s23, %s35
      %p65 = scmp.eq.s32.totalorder %s64, 0
      %s67 = sadd.s32 %s66, 1
      %s68 = scalar_select %p65, %s66, %s67
      %p71 = pneg %p65
      %p72 = scmp.eq.s32.totalorder %s16, 1
      %p73 = por %p71, %p72
      %p74 = scmp.ne.s32.totalorder %s66, %s69
      %p75 = scmp.eq.s32.totalorder %s16, 0
      %p76 = por %p74, %p75
      %p77 = scmp.ne.s32.totalorder %s66, %s69
      %p78 = scmp.eq.s32.totalorder %s21, 1
      %p79 = por %p77, %p78
      %p80 = scmp.ne.s32.totalorder %s69, %s70
      %p81 = scmp.eq.s32.totalorder %s21, 0
      %p82 = por %p80, %p81
      %p83 = scmp.ne.s32.totalorder %s69, %s70
      %p84 = scmp.eq.s32.totalorder %s22, 1
      %p85 = por %p83, %p84
      %p87 = scmp.ne.s32.totalorder %s70, %s86
      %p88 = scmp.eq.s32.totalorder %s22, 0
      %p89 = por %p87, %p88
      %s90 = ssub.s32 %s24, %s31
      %s91 = ssub.s32 %s23, %s35
      %s92 = sor.u32 %s90, %s91
      %p93 = scmp.eq.s32.totalorder %s92, 0
      %s95 = sadd.s32 %s94, 1
      %s96 = scalar_select %p93, %s94, %s95
      %p99 = pneg %p93
      %p100 = scmp.eq.s32.totalorder %s16, 1
      %p101 = por %p99, %p100
      %p102 = scmp.ne.s32.totalorder %s94, %s97
      %p103 = scmp.eq.s32.totalorder %s16, 0
      %p104 = por %p102, %p103
      %p105 = scmp.ne.s32.totalorder %s94, %s97
      %p106 = scmp.eq.s32.totalorder %s21, 1
      %p107 = por %p105, %p106
      %p108 = scmp.ne.s32.totalorder %s97, %s98
      %p109 = scmp.eq.s32.totalorder %s21, 0
      %p110 = por %p108, %p109
      %p111 = scmp.ne.s32.totalorder %s97, %s98
      %p112 = scmp.eq.s32.totalorder %s22, 1
      %p113 = por %p111, %p112
      %p115 = scmp.ne.s32.totalorder %s98, %s114
      %p116 = scmp.eq.s32.totalorder %s22, 0
      %p117 = por %p115, %p116
      %p118 = scmp.le.s32.totalorder 1, %s16
      %p119 = scmp.lt.s32.totalorder %s16, 3
      %p120 = pnand %p118, %p119
      %p121 = pneg %p120
      // Predicated region
      $region9: #{tpu_custom_call.1} parent=5 // pred_check
        _
      $region10: #{tpu_custom_call.1} parent=5 // pred_check_branch
        %123 = sbr.rel (%p120) target = $region12
      $region11: #{tpu_custom_call.1} parent=5 // pred_region
        %s124 = ssub.s32 %s16, 1
        // Predicated region
        $region13: #{tpu_custom_call.1} parent=11 // pred_check
          %p125 = pneg %p82
        $region14: #{tpu_custom_call.1} parent=11 // pred_check_branch
          %127 = sbr.rel (%p125) target = $region16
        $region15: #{tpu_custom_call.1} parent=11 // pred_region
          %p128 = scmp.lt.s32.totalorder %s25, 0
          %s129 = scalar_select %p128, %s25, 0
          %s130 = smul.addr %s129, 4
          %s131 = scalar_lea.vmem %s2, %s130
        $region16: #{tpu_custom_call.1} parent=11 // pred_fallthru
          _
      $region12: #{tpu_custom_call.1} parent=5 // pred_fallthru
        _
      %p132 = scmp.lt.s32.totalorder %s16, 2
      // Predicated region
      $region17: #{tpu_custom_call.1} parent=5 // pred_check
        %p133 = pneg %p132
      $region18: #{tpu_custom_call.1} parent=5 // pred_check_branch
        %135 = sbr.rel (%p133) target = $region20
      $region19: #{tpu_custom_call.1} parent=5 // pred_region
        // Predicated region
        $region21: #{tpu_custom_call.1} parent=19 // pred_check
          %p136 = pneg %p50
        $region22: #{tpu_custom_call.1} parent=19 // pred_check_branch
          %138 = sbr.rel (%p136) target = $region24
        $region23: #{tpu_custom_call.1} parent=19 // pred_region
          %s139 = sand.u32 %s40, 1
          %s140 = scalar_lea.sflag [#allocation5], %s139
          %s141 = sand.u32 %s40, 1
          %s142 = smul.addr %s141, 4
          %s143 = scalar_lea.vmem [#allocation4], %s142
          %s145 = ssub.s32 64, 64
          %146 = vsyncadd %s140, %s145
          %s147 = sadd.s32 %s23, %s24
          %s148 = smul.addr %s147, 64
          %s149 = scalar_lea.hbm %s1, %s148
          %s151 = sshll.u32 %s143, 4
          %s152 = int_to_ptr.vmem [resolvable:$true] %s151
          %154 = dma.hbm_to_vmem [thread:$0]  %s149, 64, %s152, %s140
        $region24: #{tpu_custom_call.1} parent=19 // pred_fallthru
          _
      $region20: #{tpu_custom_call.1} parent=5 // pred_fallthru
        _
      %p155 = scmp.le.s32.totalorder 1, %s16
      %p156 = scmp.lt.s32.totalorder %s16, 3
      %p157 = pnand %p155, %p156
      %p158 = pneg %p157
      // Predicated region
      $region25: #{tpu_custom_call.1} parent=5 // pred_check
        _
      $region26: #{tpu_custom_call.1} parent=5 // pred_check_branch
        %160 = sbr.rel (%p157) target = $region28
      $region27: #{tpu_custom_call.1} parent=5 // pred_region
        %s161 = ssub.s32 %s16, 1
        %s162 = sand.u32 %s43, 1
        %s163 = scalar_lea.sflag [#allocation5], %s162
        %s164 = sand.u32 %s43, 1
        %s165 = smul.addr %s164, 4
        %s166 = scalar_lea.vmem [#allocation4], %s165
        // Predicated region
        $region29: #{tpu_custom_call.1} parent=27 // pred_check
          %p167 = pneg %p56
        $region30: #{tpu_custom_call.1} parent=27 // pred_check_branch
          %169 = sbr.rel (%p167) target = $region32
        $region31: #{tpu_custom_call.1} parent=27 // pred_region
          %170 = dma.done %s163, 64
        $region32: #{tpu_custom_call.1} parent=27 // pred_fallthru
          _
        %s171 = sand.u32 %s43, 1
        %s172 = scalar_lea.sflag [#allocation5], %s171
        %s173 = sand.u32 %s43, 1
        %s174 = smul.addr %s173, 4
        %s175 = scalar_lea.vmem [#allocation4], %s174
        %p176 = pneg %p56
        %p177 = pneg %p53
        %p178 = scmp.lt.s32.totalorder %s25, 0
        %s179 = scalar_select %p178, %s25, 0
        %s180 = smul.addr %s179, 4
        %s181 = scalar_lea.vmem %s2, %s180
        %p182 = pneg %p82
        %p183 = pneg %p79
        %p184 = pneg %p110
        %p185 = pneg %p107
        %s186 = sand.u32 %s97, 1
        %s187 = scalar_lea.sflag [#allocation6], %s186
        %s188 = sand.u32 %s97, 1
        %s189 = smul.addr %s188, 4
        %s190 = scalar_lea.vmem [#allocation7], %s189
        %p191 = scmp.lt.s32.totalorder %s25, 0
        %s192 = scalar_select %p191, %s25, 0
        %s193 = smul.addr %s192, 4
        %s194 = scalar_lea.vmem %s2, %s193
        %s195 = sld [smem:[#allocation3]]
        %v196 = vld [vmem:[%s166] sm:$0xf]
        %v197 = vld [vmem:[%s194] sm:$0xf]
        %v198 = vstv %s195
        %v199 = vmul.f32 %v198, %v197
        %v200 = vadd.f32 %v196, %v199
        %201 = vst [vmem:[%s190] sm:$0xf] %v200
        %s202 = sand.u32 %s97, 1
        %s203 = scalar_lea.sflag [#allocation6], %s202
        %s204 = sand.u32 %s97, 1
        %s205 = smul.addr %s204, 4
        %s206 = scalar_lea.vmem [#allocation7], %s205
        // Predicated region
        $region33: #{tpu_custom_call.1} parent=27 // pred_check
          %p207 = pneg %p107
        $region34: #{tpu_custom_call.1} parent=27 // pred_check_branch
          %209 = sbr.rel (%p207) target = $region36
        $region35: #{tpu_custom_call.1} parent=27 // pred_region
          %s211 = ssub.s32 64, 64
          %212 = vsyncadd %s203, %s211
          %s213 = sadd.s32 %s25, %s26
          %s214 = smul.addr %s213, 64
          %s215 = scalar_lea.hbm %s3, %s214
          %s217 = sshll.u32 %s206, 4
          %s218 = int_to_ptr.vmem [resolvable:$true] %s217
          %220 = dma.vmem_to_hbm [thread:$0]  %s218, 64, %s215, %s203
        $region36: #{tpu_custom_call.1} parent=27 // pred_fallthru
          _
      $region28: #{tpu_custom_call.1} parent=5 // pred_fallthru
        _
      %p221 = scmp.le.s32.totalorder 2, %s16
      // Predicated region
      $region37: #{tpu_custom_call.1} parent=5 // pred_check
        %p222 = pneg %p221
      $region38: #{tpu_custom_call.1} parent=5 // pred_check_branch
        %224 = sbr.rel (%p222) target = $region40
      $region39: #{tpu_custom_call.1} parent=5 // pred_region
        %s225 = ssub.s32 %s16, 2
        // Predicated region
        $region41: #{tpu_custom_call.1} parent=39 // pred_check
          %p226 = pneg %p113
        $region42: #{tpu_custom_call.1} parent=39 // pred_check_branch
          %228 = sbr.rel (%p226) target = $region44
        $region43: #{tpu_custom_call.1} parent=39 // pred_region
          %s229 = sand.u32 %s98, 1
          %s230 = scalar_lea.sflag [#allocation6], %s229
          %s231 = sand.u32 %s98, 1
          %s232 = smul.addr %s231, 4
          %s233 = scalar_lea.vmem [#allocation7], %s232
          %234 = dma.done %s230, 64
        $region44: #{tpu_custom_call.1} parent=39 // pred_fallthru
          _
      $region40: #{tpu_custom_call.1} parent=5 // pred_fallthru
        _
    $region6: #{tpu_custom_call.1} parent=1 // loop_footer
      %s20 = sadd.s32 1, %s16
    $region7: #{tpu_custom_call.1} parent=1 // loop_footer_branch
      %15 = sbr.rel target = $region3
    $region8: #{tpu_custom_call.1} parent=1 // loop_exit
      _
    %235 = vsyncpa [#allocation5], 1
    %s236 = scalar_lea.sflag [#allocation5], 1
    %237 = vsyncpa %s236, 1
    %238 = vsyncpa [#allocation6], 1
    %s239 = scalar_lea.sflag [#allocation6], 1
    %240 = vsyncpa %s239, 1

</llo_original>
